<compile_context>
chip_gen: v5e
topology: v5e:2x2
jax: 0.10.0
libtpu: 0.0.40
codegen_flags: <defaults>
</compile_context>

<pallas_src>
import functools

import jax
import jax.numpy as jnp
from jax import lax
from jax.experimental import pallas as pl
from jax.experimental.pallas import tpu as pltpu


def _round_up(x, m):
    return ((x + m - 1) // m) * m


def _choose_tiles(n, c, in_bytes):
    """Pick (tile_n, tile_c, vmem_limit_bytes) from the chip's VMEM capacity."""
    try:
        vmem_cap = int(pltpu.get_tpu_info().vmem_capacity_bytes)
    except Exception:  # pragma: no cover - conservative fallback (v7x physical VMEM)
        vmem_cap = 64 * 1024 * 1024
    # rough per-element VMEM cost: double-buffered input block + ~3 f32 temporaries
    bpe = 2 * in_bytes + 12
    budget = vmem_cap // 3  # headroom for scratch, output blocks, spills

    tile_n = min(512, _round_up(n, 8))  # ~85% of HBM roofline at 512-row tiles (v6e)
    if tile_n * c * bpe <= budget:
        tile_c = c  # full vocab fits in one class tile
    elif c % 128 == 0:
        # class-tiled online softmax: largest 128-multiple divisor of c that fits
        max_tc = min(c, (budget // (tile_n * bpe)) // 128 * 128)
        tile_c = 128
        for cand in range(max_tc, 127, -128):
            if c % cand == 0:
                tile_c = cand
                break
    else:
        # TODO(synk): mask a padded class axis so huge non-128-multiple vocabs can be
        # class-tiled too; for now shrink the row tile instead.
        tile_c = c
        while tile_n > 8 and tile_n * c * bpe > budget:
            tile_n -= 8

    needed = (2 * tile_n * tile_c * in_bytes  # double-buffered logits block
              + 3 * tile_n * tile_c * 4       # f32 temporaries
              + 8 * tile_n * 4)               # scratch vectors + output block
    vmem_limit = min(vmem_cap - (8 << 20), max(2 * needed, 32 << 20))
    return tile_n, tile_c, int(vmem_limit)


def _ce_kernel(logits_ref, labels_ref, out_ref,
               m_sc, s_sc, xl_sc, sx_sc,
               *, label_smoothing, total_n, tile_n, tile_c, num_classes):
    """Online-softmax label-smoothing CE; writes per-row losses for one row tile."""
    i = pl.program_id(0)  # row-tile axis ("parallel")
    j = pl.program_id(1)  # class-tile axis ("arbitrary", reduction)

    @pl.when(j == 0)
    def _():
        m_sc[...] = jnp.full_like(m_sc, -jnp.inf)
        s_sc[...] = jnp.zeros_like(s_sc)
        xl_sc[...] = jnp.zeros_like(xl_sc)
        sx_sc[...] = jnp.zeros_like(sx_sc)

    x = logits_ref[...].astype(jnp.float32)                 # (tile_n, tile_c)

    # online running max / sum-exp (numerically stable logsumexp)
    blk_max = jnp.max(x, axis=-1, keepdims=True)            # (tile_n, 1)
    m_new = jnp.maximum(m_sc[...], blk_max)
    alpha = jnp.exp(m_sc[...] - m_new)
    s_sc[...] = alpha * s_sc[...] + jnp.sum(jnp.exp(x - m_new), axis=-1, keepdims=True)
    m_sc[...] = m_new

    # running sum of logits (for the smoothing mean) and pick up x[label]
    sx_sc[...] += jnp.sum(x, axis=-1, keepdims=True)
    labels = labels_ref[...]                                 # (tile_n, 1) int32
    col = j * tile_c + lax.broadcasted_iota(jnp.int32, x.shape, 1)
    xl_sc[...] += jnp.sum(jnp.where(col == labels, x, 0.0), axis=-1, keepdims=True)

    @pl.when(j == pl.num_programs(1) - 1)
    def _():
        confidence = 1.0 - label_smoothing
        lse = m_sc[...] + jnp.log(s_sc[...])                 # (tile_n, 1) total logsumexp
        nll = lse - xl_sc[...]                               # -logprobs[label]
        smooth = lse - sx_sc[...] * (1.0 / num_classes)      # -mean(logprobs)
        loss = confidence * nll + label_smoothing * smooth
        # mask padded tail rows
        row = i * tile_n + lax.broadcasted_iota(jnp.int32, loss.shape, 0)
        out_ref[...] = jnp.where(row < total_n, loss, 0.0)


def cross_entropy_loss(logits, labels, label_smoothing=0.0):
    """Pallas TPU label-smoothing cross-entropy; returns scalar mean loss."""
    n, c = logits.shape
    in_bytes = jnp.dtype(logits.dtype).itemsize
    tile_n, tile_c, vmem_limit = _choose_tiles(n, c, in_bytes)

    n_pad = _round_up(n, tile_n)
    if n_pad != n:
        logits = jnp.pad(logits, ((0, n_pad - n), (0, 0)))
        labels = jnp.pad(labels, (0, n_pad - n))
    labels2d = labels.astype(jnp.int32).reshape(n_pad, 1)

    kernel = functools.partial(
        _ce_kernel,
        label_smoothing=float(label_smoothing),
        total_n=n, tile_n=tile_n, tile_c=tile_c, num_classes=c,
    )

    per_row = pl.pallas_call(
        kernel,
        out_shape=jax.ShapeDtypeStruct((n_pad, 1), jnp.float32),
        grid_spec=pltpu.PrefetchScalarGridSpec(
            num_scalar_prefetch=0,
            grid=(n_pad // tile_n, c // tile_c),
            in_specs=[
                pl.BlockSpec((tile_n, tile_c), lambda i, j: (i, j)),
                pl.BlockSpec((tile_n, 1), lambda i, j: (i, 0)),
            ],
            out_specs=pl.BlockSpec((tile_n, 1), lambda i, j: (i, 0)),
            scratch_shapes=[pltpu.VMEM((tile_n, 1), jnp.float32)] * 4,
        ),
        compiler_params=pltpu.CompilerParams(
            dimension_semantics=("parallel", "arbitrary"),
            vmem_limit_bytes=vmem_limit,
        ),
    )(logits, labels2d)

    # tiny cross-tile reduce + mean done in plain JAX (n_pad f32 values)
    return jnp.sum(per_row) / jnp.float32(n)


def _reference(logits, labels, label_smoothing=0.0):
    confidence = 1.0 - label_smoothing
    logprobs = jax.nn.log_softmax(logits.astype(jnp.float32), axis=-1)
    nll = -jnp.take_along_axis(logprobs, labels[:, None], axis=-1)[:, 0]
    smooth = -jnp.mean(logprobs, axis=-1)
    loss = confidence * nll + label_smoothing * smooth
    return jnp.sum(loss) / logits.shape[0]


if __name__ == "__main__":
    key = jax.random.PRNGKey(0)
    k1, k2 = jax.random.split(key)

    N, C = 16, 32          # small batch of 16 examples, 32 classes
    label_smoothing = 0.1

    logits = jax.random.normal(k1, (N, C), dtype=jnp.float32)
    labels = jax.random.randint(k2, (N,), 0, C, dtype=jnp.int32)

    loss = cross_entropy_loss(logits, labels, label_smoothing=label_smoothing)
    loss = jax.block_until_ready(loss)

    ref = _reference(logits, labels, label_smoothing=label_smoothing)
    assert jnp.allclose(loss, ref, rtol=1e-5, atol=1e-5), (loss, ref)
    print("KERNEL_OK")
</pallas_src>

<mosaic_0001>
module attributes {stable_mosaic.version = 11 : i64} {
  func.func @_ce_kernel(%arg0: i32, %arg1: i32, %arg2: memref<16x32xf32, #tpu.memory_space<vmem>>, %arg3: memref<16x1xi32, #tpu.memory_space<vmem>>, %arg4: memref<16x1xf32, #tpu.memory_space<vmem>>, %arg5: memref<16x1xf32, #tpu.memory_space<vmem>>, %arg6: memref<16x1xf32, #tpu.memory_space<vmem>>, %arg7: memref<16x1xf32, #tpu.memory_space<vmem>>, %arg8: memref<16x1xf32, #tpu.memory_space<vmem>>) attributes {dimension_semantics = [#tpu.dimension_semantics<parallel>, #tpu.dimension_semantics<arbitrary>], iteration_bounds = array<i64: 1, 1>, scalar_prefetch = 0 : i64, scratch_operands = 4 : i64, tpu.core_type = #tpu.core_type<tc>, window_params = [{transform_indices = @transform_0, window_bounds = array<i64: 16, 32>}, {transform_indices = @transform_1, window_bounds = array<i64: 16, 1>}, {transform_indices = @transform_2, window_bounds = array<i64: 16, 1>}]} {
    %c0_i32 = arith.constant 0 : i32
    %0 = arith.cmpi eq, %arg1, %c0_i32 : i32
    %1 = arith.extui %0 : i1 to i32
    %c0_i32_0 = arith.constant 0 : i32
    %2 = arith.cmpi ne, %1, %c0_i32_0 : i32
    scf.if %2 {
      %cst_28 = arith.constant 0xFF800000 : f32
      %43 = vector.broadcast %cst_28 : f32 to vector<16x1xf32>
      %c0_29 = arith.constant 0 : index
      %c0_30 = arith.constant 0 : index
      %44 = vector.load %arg5[%c0_29, %c0_30] : memref<16x1xf32, #tpu.memory_space<vmem>>, vector<16x1xf32>
      tpu.vector_store %arg5[%c0_29, %c0_30], %43 {strides = array<i32>} : memref<16x1xf32, #tpu.memory_space<vmem>>, vector<16x1xf32>,
      %cst_31 = arith.constant 0.000000e+00 : f32
      %45 = vector.broadcast %cst_31 : f32 to vector<16x1xf32>
      %c0_32 = arith.constant 0 : index
      %c0_33 = arith.constant 0 : index
      %46 = vector.load %arg6[%c0_32, %c0_33] : memref<16x1xf32, #tpu.memory_space<vmem>>, vector<16x1xf32>
      tpu.vector_store %arg6[%c0_32, %c0_33], %45 {strides = array<i32>} : memref<16x1xf32, #tpu.memory_space<vmem>>, vector<16x1xf32>,
      %cst_34 = arith.constant 0.000000e+00 : f32
      %47 = vector.broadcast %cst_34 : f32 to vector<16x1xf32>
      %c0_35 = arith.constant 0 : index
      %c0_36 = arith.constant 0 : index
      %48 = vector.load %arg7[%c0_35, %c0_36] : memref<16x1xf32, #tpu.memory_space<vmem>>, vector<16x1xf32>
      tpu.vector_store %arg7[%c0_35, %c0_36], %47 {strides = array<i32>} : memref<16x1xf32, #tpu.memory_space<vmem>>, vector<16x1xf32>,
      %cst_37 = arith.constant 0.000000e+00 : f32
      %49 = vector.broadcast %cst_37 : f32 to vector<16x1xf32>
      %c0_38 = arith.constant 0 : index
      %c0_39 = arith.constant 0 : index
      %50 = vector.load %arg8[%c0_38, %c0_39] : memref<16x1xf32, #tpu.memory_space<vmem>>, vector<16x1xf32>
      tpu.vector_store %arg8[%c0_38, %c0_39], %49 {strides = array<i32>} : memref<16x1xf32, #tpu.memory_space<vmem>>, vector<16x1xf32>,
    } else {
    }
    %c0 = arith.constant 0 : index
    %c0_1 = arith.constant 0 : index
    %3 = vector.load %arg2[%c0, %c0_1] : memref<16x32xf32, #tpu.memory_space<vmem>>, vector<16x32xf32>
    %cst = arith.constant dense<0xFF800000> : vector<16xf32>
    %4 = vector.multi_reduction <maximumf>, %3, %cst [1] : vector<16x32xf32> to vector<16xf32>
    %5 = vector.shape_cast %4 : vector<16xf32> to vector<16x1xf32>
    %c0_2 = arith.constant 0 : index
    %c0_3 = arith.constant 0 : index
    %6 = vector.load %arg5[%c0_2, %c0_3] : memref<16x1xf32, #tpu.memory_space<vmem>>, vector<16x1xf32>
    %7 = arith.maximumf %6, %5 : vector<16x1xf32>
    %c0_4 = arith.constant 0 : index
    %c0_5 = arith.constant 0 : index
    %8 = vector.load %arg5[%c0_4, %c0_5] : memref<16x1xf32, #tpu.memory_space<vmem>>, vector<16x1xf32>
    %9 = arith.subf %8, %7 : vector<16x1xf32>
    %10 = math.exp %9 : vector<16x1xf32>
    %c0_6 = arith.constant 0 : index
    %c0_7 = arith.constant 0 : index
    %11 = vector.load %arg6[%c0_6, %c0_7] : memref<16x1xf32, #tpu.memory_space<vmem>>, vector<16x1xf32>
    %12 = arith.mulf %10, %11 : vector<16x1xf32>
    %13 = vector.broadcast %7 : vector<16x1xf32> to vector<16x32xf32>
    %14 = arith.subf %3, %13 : vector<16x32xf32>
    %15 = math.exp %14 : vector<16x32xf32>
    %cst_8 = arith.constant dense<0.000000e+00> : vector<16xf32>
    %16 = vector.multi_reduction <add>, %15, %cst_8 [1] : vector<16x32xf32> to vector<16xf32>
    %17 = vector.shape_cast %16 : vector<16xf32> to vector<16x1xf32>
    %18 = arith.addf %12, %17 : vector<16x1xf32>
    %c0_9 = arith.constant 0 : index
    %c0_10 = arith.constant 0 : index
    %19 = vector.load %arg6[%c0_9, %c0_10] : memref<16x1xf32, #tpu.memory_space<vmem>>, vector<16x1xf32>
    tpu.vector_store %arg6[%c0_9, %c0_10], %18 {strides = array<i32>} : memref<16x1xf32, #tpu.memory_space<vmem>>, vector<16x1xf32>,
    %c0_11 = arith.constant 0 : index
    %c0_12 = arith.constant 0 : index
    %20 = vector.load %arg5[%c0_11, %c0_12] : memref<16x1xf32, #tpu.memory_space<vmem>>, vector<16x1xf32>
    tpu.vector_store %arg5[%c0_11, %c0_12], %7 {strides = array<i32>} : memref<16x1xf32, #tpu.memory_space<vmem>>, vector<16x1xf32>,
    %c0_13 = arith.constant 0 : index
    %c0_14 = arith.constant 0 : index
    %21 = vector.load %arg8[%c0_13, %c0_14] : memref<16x1xf32, #tpu.memory_space<vmem>>, vector<16x1xf32>
    %cst_15 = arith.constant dense<0.000000e+00> : vector<16xf32>
    %22 = vector.multi_reduction <add>, %3, %cst_15 [1] : vector<16x32xf32> to vector<16xf32>
    %23 = vector.shape_cast %22 : vector<16xf32> to vector<16x1xf32>
    %24 = arith.addf %21, %23 : vector<16x1xf32>
    %c0_16 = arith.constant 0 : index
    %c0_17 = arith.constant 0 : index
    %25 = vector.load %arg8[%c0_16, %c0_17] : memref<16x1xf32, #tpu.memory_space<vmem>>, vector<16x1xf32>
    tpu.vector_store %arg8[%c0_16, %c0_17], %24 {strides = array<i32>} : memref<16x1xf32, #tpu.memory_space<vmem>>, vector<16x1xf32>,
    %c0_18 = arith.constant 0 : index
    %c0_19 = arith.constant 0 : index
    %26 = vector.load %arg3[%c0_18, %c0_19] : memref<16x1xi32, #tpu.memory_space<vmem>>, vector<16x1xi32>
    %c32_i32 = arith.constant 32 : i32
    %27 = arith.muli %arg1, %c32_i32 : i32
    %28 = tpu.iota {dimensions = array<i32: 1>} : vector<16x32xi32>
    %29 = vector.broadcast %27 : i32 to vector<16x32xi32>
    %30 = arith.addi %29, %28 : vector<16x32xi32>
    %c0_20 = arith.constant 0 : index
    %c0_21 = arith.constant 0 : index
    %31 = vector.load %arg7[%c0_20, %c0_21] : memref<16x1xf32, #tpu.memory_space<vmem>>, vector<16x1xf32>
    %32 = vector.broadcast %26 : vector<16x1xi32> to vector<16x32xi32>
    %33 = arith.cmpi eq, %30, %32 : vector<16x32xi32>
    %cst_22 = arith.constant 0.000000e+00 : f32
    %34 = vector.broadcast %cst_22 : f32 to vector<16x32xf32>
    %35 = arith.select %33, %3, %34 : vector<16x32xi1>, vector<16x32xf32>
    %cst_23 = arith.constant dense<0.000000e+00> : vector<16xf32>
    %36 = vector.multi_reduction <add>, %35, %cst_23 [1] : vector<16x32xf32> to vector<16xf32>
    %37 = vector.shape_cast %36 : vector<16xf32> to vector<16x1xf32>
    %38 = arith.addf %31, %37 : vector<16x1xf32>
    %c0_24 = arith.constant 0 : index
    %c0_25 = arith.constant 0 : index
    %39 = vector.load %arg7[%c0_24, %c0_25] : memref<16x1xf32, #tpu.memory_space<vmem>>, vector<16x1xf32>
    tpu.vector_store %arg7[%c0_24, %c0_25], %38 {strides = array<i32>} : memref<16x1xf32, #tpu.memory_space<vmem>>, vector<16x1xf32>,
    %c0_i32_26 = arith.constant 0 : i32
    %40 = arith.cmpi eq, %arg1, %c0_i32_26 : i32
    %41 = arith.extui %40 : i1 to i32
    %c0_i32_27 = arith.constant 0 : i32
    %42 = arith.cmpi ne, %41, %c0_i32_27 : i32
    scf.if %42 {
      %c0_28 = arith.constant 0 : index
      %c0_29 = arith.constant 0 : index
      %43 = vector.load %arg5[%c0_28, %c0_29] : memref<16x1xf32, #tpu.memory_space<vmem>>, vector<16x1xf32>
      %c0_30 = arith.constant 0 : index
      %c0_31 = arith.constant 0 : index
      %44 = vector.load %arg6[%c0_30, %c0_31] : memref<16x1xf32, #tpu.memory_space<vmem>>, vector<16x1xf32>
      %45 = math.log %44 : vector<16x1xf32>
      %46 = arith.addf %43, %45 : vector<16x1xf32>
      %c0_32 = arith.constant 0 : index
      %c0_33 = arith.constant 0 : index
      %47 = vector.load %arg7[%c0_32, %c0_33] : memref<16x1xf32, #tpu.memory_space<vmem>>, vector<16x1xf32>
      %48 = arith.subf %46, %47 : vector<16x1xf32>
      %c0_34 = arith.constant 0 : index
      %c0_35 = arith.constant 0 : index
      %49 = vector.load %arg8[%c0_34, %c0_35] : memref<16x1xf32, #tpu.memory_space<vmem>>, vector<16x1xf32>
      %cst_36 = arith.constant 3.125000e-02 : f32
      %50 = vector.broadcast %cst_36 : f32 to vector<16x1xf32>
      %51 = arith.mulf %49, %50 : vector<16x1xf32>
      %52 = arith.subf %46, %51 : vector<16x1xf32>
      %cst_37 = arith.constant 0.899999976 : f32
      %53 = vector.broadcast %cst_37 : f32 to vector<16x1xf32>
      %54 = arith.mulf %53, %48 : vector<16x1xf32>
      %cst_38 = arith.constant 1.000000e-01 : f32
      %55 = vector.broadcast %cst_38 : f32 to vector<16x1xf32>
      %56 = arith.mulf %55, %52 : vector<16x1xf32>
      %57 = arith.addf %54, %56 : vector<16x1xf32>
      %c16_i32 = arith.constant 16 : i32
      %58 = arith.muli %arg0, %c16_i32 : i32
      %59 = tpu.iota {dimensions = array<i32: 0>} : vector<16x1xi32>
      %60 = vector.broadcast %58 : i32 to vector<16x1xi32>
      %61 = arith.addi %60, %59 : vector<16x1xi32>
      %c16_i32_39 = arith.constant 16 : i32
      %62 = vector.broadcast %c16_i32_39 : i32 to vector<16x1xi32>
      %63 = arith.cmpi slt, %61, %62 : vector<16x1xi32>
      %cst_40 = arith.constant 0.000000e+00 : f32
      %64 = vector.broadcast %cst_40 : f32 to vector<16x1xf32>
      %65 = arith.select %63, %57, %64 : vector<16x1xi1>, vector<16x1xf32>
      %c0_41 = arith.constant 0 : index
      %c0_42 = arith.constant 0 : index
      %66 = vector.load %arg4[%c0_41, %c0_42] : memref<16x1xf32, #tpu.memory_space<vmem>>, vector<16x1xf32>
      tpu.vector_store %arg4[%c0_41, %c0_42], %65 {strides = array<i32>} : memref<16x1xf32, #tpu.memory_space<vmem>>, vector<16x1xf32>,
    } else {
    }
    return
  }
  func.func @transform_0(%arg0: i32, %arg1: i32) -> (i32, i32) {
    %c0_i32 = arith.constant 0 : i32
    return %arg0, %arg1 : i32, i32
  }
  func.func @transform_1(%arg0: i32, %arg1: i32) -> (i32, i32) {
    %c0_i32 = arith.constant 0 : i32
    %c0_i32_0 = arith.constant 0 : i32
    return %arg0, %c0_i32 : i32, i32
  }
  func.func @transform_2(%arg0: i32, %arg1: i32) -> (i32, i32) {
    %c0_i32 = arith.constant 0 : i32
    %c0_i32_0 = arith.constant 0 : i32
    return %arg0, %c0_i32 : i32, i32
  }
}

</mosaic_0001>

<llo_original>
// kernel: tpu_custom_call.1
$region0: #{tpu_custom_call.1}
  #allocation0 [shape = 'u32[]', space=smem, size = 0x4, offset = 0x4, fixed_abs, tag = 'smem constant byte address 0x4 - core index']
  #allocation1 [shape = 'u32[72,128]{1,0:T(1,128)}', space=vmem, size = 0x9000, scoped, tag = 'internal scratch']
  #allocation2 [shape = 'f32[16,1]{1,0:T(8,128)}', space=vmem, size = 0x2000, scoped, tag = 'scratch operand']
  #allocation3 [shape = 'f32[16,1]{1,0:T(8,128)}', space=vmem, size = 0x2000, scoped, tag = 'scratch operand']
  #allocation4 [shape = 'f32[16,1]{1,0:T(8,128)}', space=vmem, size = 0x2000, scoped, tag = 'scratch operand']
  #allocation5 [shape = 'f32[16,1]{1,0:T(8,128)}', space=vmem, size = 0x2000, scoped, tag = 'scratch operand']
  %s0 = inlined_call_operand.vmem [shape: f32[16,32], index: 0, kind: input, shape index: {}]
  %s1 = inlined_call_operand.vmem [shape: s32[16,1], index: 1, kind: input, shape index: {}]
  %s2 = inlined_call_operand.vmem [shape: f32[16,1], index: 2, kind: output, shape index: {}]
  %s3 = sld [smem:[#allocation0]]
  $region26: #{tpu_custom_call.1} parent=0
    _
  %s5 = ssub.s32 1, %s3
  %s6 = scalar_select 0, %s5, %s3
  // Predicated region
  $region2: #{tpu_custom_call.1} parent=0 // pred_check
    _
  $region3: #{tpu_custom_call.1} parent=0 // pred_check_branch
    %8 = sbr.rel (0) target = $region5
  $region4: #{tpu_custom_call.1} parent=0 // pred_region
    _
  $region5: #{tpu_custom_call.1} parent=0 // pred_fallthru
    _
  // Predicated region
  $region6: #{tpu_custom_call.1} parent=0 // pred_check
    _
  $region7: #{tpu_custom_call.1} parent=0 // pred_check_branch
    %10 = sbr.rel (0) target = $region9
  $region8: #{tpu_custom_call.1} parent=0 // pred_region
    _
  $region9: #{tpu_custom_call.1} parent=0 // pred_fallthru
    _
  %p11 = scmp.eq.s32.totalorder 0, 0
  // Predicated region
  $region10: #{tpu_custom_call.1} parent=0 // pred_check
    %p12 = pneg %p11
  $region11: #{tpu_custom_call.1} parent=0 // pred_check_branch
    %14 = sbr.rel (%p12) target = $region13
  $region12: #{tpu_custom_call.1} parent=0 // pred_region
    %vm15 = vcmask 7168
    %16 = vst.msk [vmem:[#allocation2] sm:$0xff] %vm15, -inf
    %17 = vst.msk [vmem:[#allocation2 + $0x8] sm:$0xff] %vm15, -inf
    %18 = vst.msk [vmem:[#allocation3] sm:$0xff] %vm15, 0.0
    %19 = vst.msk [vmem:[#allocation3 + $0x8] sm:$0xff] %vm15, 0.0
    %20 = vst.msk [vmem:[#allocation4] sm:$0xff] %vm15, 0.0
    %21 = vst.msk [vmem:[#allocation4 + $0x8] sm:$0xff] %vm15, 0.0
    %22 = vst.msk [vmem:[#allocation5] sm:$0xff] %vm15, 0.0
    %23 = vst.msk [vmem:[#allocation5 + $0x8] sm:$0xff] %vm15, 0.0
  $region13: #{tpu_custom_call.1} parent=0 // pred_fallthru
    _
  %v24 = vld [vmem:[%s0] sm:$0xff]
  %v25 = vld [vmem:[%s0 + $0x8] sm:$0xff]
  %vm26 = vcmask 261120
  %v27 = vsel %vm26, %v24, -inf
  %28 = vmax.xlane.f32.xlu0 %v27
  %v29 = vpop.xlane.xlu0 %28
  %v30 = vsel %vm26, %v25, -inf
  %31 = vmax.xlane.f32.xlu0 %v30
  %v32 = vpop.xlane.xlu0 %31
  %v33 = vld [vmem:[#allocation2] sm:$0xff]
  %v34 = vld [vmem:[#allocation2 + $0x8] sm:$0xff]
  %v35 = vmax.f32 %v33, %v29
  %v36 = vmax.f32 %v34, %v32
  %v37 = vsub.f32 %v33, %v35
  %v38 = vsub.f32 %v34, %v36
  %v39 = vmul.f32 %v37, 1.442695
  %v40 = vpow.pop %v39
  %v41 = vmul.f32 %v38, 1.442695
  %v42 = vpow.pop %v41
  %v43 = vld [vmem:[#allocation3] sm:$0xff]
  %v44 = vld [vmem:[#allocation3 + $0x8] sm:$0xff]
  %v45 = vmul.f32 %v40, %v43
  %v46 = vmul.f32 %v42, %v44
  %48 = vset.pattern.permute.xlu0 0
  %49 = vperm.xlu0 %48, %v35
  %v50 = vpop.permute.xlu0 %49
  %53 = vset.pattern.permute.xlu0 0
  %54 = vperm.xlu0 %53, %v36
  %v55 = vpop.permute.xlu0 %54
  %v57 = vsub.f32 %v24, %v50
  %v58 = vsub.f32 %v25, %v55
  %v59 = vmul.f32 %v57, 1.442695
  %v60 = vpow.pop %v59
  %v61 = vmul.f32 %v58, 1.442695
  %v62 = vpow.pop %v61
  %v63 = vsel %vm26, %v60, 0.0
  %64 = vadd.xlane.f32.xlu0 %v63
  %v65 = vpop.xlane.xlu0 %64
  %v66 = vsel %vm26, %v62, 0.0
  %67 = vadd.xlane.f32.xlu0 %v66
  %v68 = vpop.xlane.xlu0 %67
  %v69 = vadd.f32 %v45, %v65
  %v70 = vadd.f32 %v46, %v68
  %vm71 = vcmask 7168
  %72 = vst.msk [vmem:[#allocation3] sm:$0xff] %vm71, %v69
  %73 = vst.msk [vmem:[#allocation3 + $0x8] sm:$0xff] %vm71, %v70
  %74 = vst.msk [vmem:[#allocation2] sm:$0xff] %vm71, %v35
  %75 = vst.msk [vmem:[#allocation2 + $0x8] sm:$0xff] %vm71, %v36
  %v76 = vld [vmem:[#allocation5] sm:$0xff]
  %v77 = vld [vmem:[#allocation5 + $0x8] sm:$0xff]
  %v78 = vsel %vm26, %v24, 0.0
  %79 = vadd.xlane.f32.xlu0 %v78
  %v80 = vpop.xlane.xlu0 %79
  %v81 = vsel %vm26, %v25, 0.0
  %82 = vadd.xlane.f32.xlu0 %v81
  %v83 = vpop.xlane.xlu0 %82
  %v84 = vadd.f32 %v76, %v80
  %v85 = vadd.f32 %v77, %v83
  %86 = vst.msk [vmem:[#allocation5] sm:$0xff] %vm71, %v84
  %87 = vst.msk [vmem:[#allocation5 + $0x8] sm:$0xff] %vm71, %v85
  %v88 = vld [vmem:[%s1] sm:$0xff]
  %v89 = vld [vmem:[%s1 + $0x8] sm:$0xff]
  %s90 = smul.u32 0, 32
  %v91 = vlaneseq
  %v92 = vand.u32 %v91, 127
  %v93 = vstv %s90
  %v94 = vadd.s32 %v93, %v92
  %v95 = vld [vmem:[#allocation4] sm:$0xff]
  %v96 = vld [vmem:[#allocation4 + $0x8] sm:$0xff]
  %97 = vset.pattern.permute.xlu0 0
  %98 = vperm.xlu0 %97, %v88
  %v99 = vpop.permute.xlu0 %98
  %100 = vset.pattern.permute.xlu0 0
  %101 = vperm.xlu0 %100, %v89
  %v102 = vpop.permute.xlu0 %101
  %vm103 = vcmp.eq.s32.totalorder %v94, %v99
  %vm104 = vcmp.eq.s32.totalorder %v94, %v102
  %v105 = vsel %vm103, %v24, 0.0
  %v106 = vsel %vm104, %v25, 0.0
  %v107 = vsel %vm26, %v105, 0.0
  %108 = vadd.xlane.f32.xlu0 %v107
  %v109 = vpop.xlane.xlu0 %108
  %v110 = vsel %vm26, %v106, 0.0
  %111 = vadd.xlane.f32.xlu0 %v110
  %v112 = vpop.xlane.xlu0 %111
  %v113 = vadd.f32 %v95, %v109
  %v114 = vadd.f32 %v96, %v112
  %115 = vst.msk [vmem:[#allocation4] sm:$0xff] %vm71, %v113
  %116 = vst.msk [vmem:[#allocation4 + $0x8] sm:$0xff] %vm71, %v114
  // Predicated region
  $region14: #{tpu_custom_call.1} parent=0 // pred_check
    %p117 = pneg %p11
  $region15: #{tpu_custom_call.1} parent=0 // pred_check_branch
    %119 = sbr.rel (%p117) target = $region17
  $region16: #{tpu_custom_call.1} parent=0 // pred_region
    %v120 = vld [vmem:[#allocation2] sm:$0xff]
    %v121 = vld [vmem:[#allocation2 + $0x8] sm:$0xff]
    %v122 = vld [vmem:[#allocation3] sm:$0xff]
    %v123 = vld [vmem:[#allocation3 + $0x8] sm:$0xff]
    %v124 = vlog2.pop %v122
    %v125 = vmul.f32 %v124, 0.6931472
    %v126 = vlog2.pop %v123
    %v127 = vmul.f32 %v126, 0.6931472
    %v128 = vadd.f32 %v120, %v125
    %v129 = vadd.f32 %v121, %v127
    %v130 = vld [vmem:[#allocation4] sm:$0xff]
    %v131 = vld [vmem:[#allocation4 + $0x8] sm:$0xff]
    %v132 = vsub.f32 %v128, %v130
    %v133 = vsub.f32 %v129, %v131
    %v134 = vld [vmem:[#allocation5] sm:$0xff]
    %v135 = vld [vmem:[#allocation5 + $0x8] sm:$0xff]
    %v136 = vmul.f32 %v134, 0.03125
    %v137 = vmul.f32 %v135, 0.03125
    %v138 = vsub.f32 %v128, %v136
    %v139 = vsub.f32 %v129, %v137
    %v140 = vmul.f32 %v132, 0.9
    %v141 = vmul.f32 %v133, 0.9
    %v142 = vmul.f32 %v138, 0.1
    %v143 = vmul.f32 %v139, 0.1
    %v144 = vadd.f32 %v140, %v142
    %v145 = vadd.f32 %v141, %v143
    %s146 = smul.u32 0, 16
    %v147 = vlaneseq
    %v148 = vshrl.u32 %v147, 7
    %v149 = vadd.s32 %v148, 8
    %v150 = vstv %s146
    %v151 = vadd.s32 %v150, %v148
    %v152 = vadd.s32 %v150, %v149
    %vm153 = vcmp.lt.s32.totalorder %v151, 16
    %vm154 = vcmp.lt.s32.totalorder %v152, 16
    %v155 = vsel %vm153, %v144, 0.0
    %v156 = vsel %vm154, %v145, 0.0
    %157 = vst.msk [vmem:[%s2] sm:$0xff] %vm71, %v155
    %158 = vst.msk [vmem:[%s2 + $0x8] sm:$0xff] %vm71, %v156
  $region17: #{tpu_custom_call.1} parent=0 // pred_fallthru
    _
  // Predicated region
  $region18: #{tpu_custom_call.1} parent=0 // pred_check
    _
  $region19: #{tpu_custom_call.1} parent=0 // pred_check_branch
    %160 = sbr.rel (0) target = $region21
  $region20: #{tpu_custom_call.1} parent=0 // pred_region
    _
  $region21: #{tpu_custom_call.1} parent=0 // pred_fallthru
    _
  // Predicated region
  $region22: #{tpu_custom_call.1} parent=0 // pred_check
    _
  $region23: #{tpu_custom_call.1} parent=0 // pred_check_branch
    %162 = sbr.rel (0) target = $region25
  $region24: #{tpu_custom_call.1} parent=0 // pred_region
    _
  $region25: #{tpu_custom_call.1} parent=0 // pred_fallthru
    _

</llo_original>
